<compile_context>
chip_gen: v7x
topology: tpu7x:2x2x1
jax: 0.10.0
libtpu: 0.0.40
codegen_flags: <defaults>
</compile_context>

<pallas_src>
import functools

import jax
import jax.numpy as jnp
from jax import lax
from jax.experimental import pallas as pl
from jax.experimental.pallas import tpu as pltpu

_LANES = 128
_FAST_PATH_MAX_ROWS = 8192   # (8192, 128) f32 = 4 MiB single block (n <= 1,048,576)
_TILED_BLOCK_ROWS = 4096     # (4096, 128) f32 = 2 MiB per pipelined block
_VMEM_LIMIT_BYTES = 32 * 1024 * 1024


def _softmax_single_block_kernel(x_ref, o_ref):
    """Whole vector in one sublane-dense (rows, 128) VMEM tile; one HBM read."""
    x = x_ref[...].astype(jnp.float32)
    e = jnp.exp(x)                                   # EUP
    inv = 1.0 / jnp.sum(e, keepdims=True)            # (1, 1) exact divide
    o_ref[...] = (e * inv).astype(o_ref.dtype)


def _softmax_two_phase_kernel(x_ref, o_ref, sumvec_ref, inv_ref, *,
                              total_rows, block_rows):
    """grid = (2, num_chunks): phase 0 = sum(exp), phase 1 = normalize.

    exp is recomputed in both phases (EUP slot; free under a mem-bound
    roofline) so exp(x) is never materialized to HBM: total traffic = 3N.
    """
    phase = pl.program_id(0)
    chunk = pl.program_id(1)

    @pl.when((phase == 0) & (chunk == 0))
    def _init():
        sumvec_ref[...] = jnp.zeros_like(sumvec_ref)

    x = x_ref[...].astype(jnp.float32)

    @pl.when(phase == 0)
    def _accumulate():
        # Mask rows that fall past the end of the array (partial last chunk):
        # Pallas pads OOB reads with garbage, so force them to -inf -> exp==0.
        row = chunk * block_rows + lax.broadcasted_iota(jnp.int32, x.shape, 0)
        xm = jnp.where(row < total_rows, x, -jnp.inf)
        # (1, 128) vector accumulator: per-chunk VPU adds + one sublane reduce.
        sumvec_ref[...] += jnp.sum(jnp.exp(xm), axis=0, keepdims=True)

    @pl.when((phase == 1) & (chunk == 0))
    def _finalize_sum():
        # Single cross-lane reduce + exact reciprocal, reused by all chunks.
        inv_ref[...] = 1.0 / jnp.sum(sumvec_ref[...], keepdims=True)

    @pl.when(phase == 1)
    def _normalize():
        # OOB rows of the last chunk produce garbage here, but Pallas drops
        # out-of-bounds rows on writeback, so no store mask is needed.
        o_ref[...] = (jnp.exp(x) * inv_ref[...]).astype(o_ref.dtype)


def softmax(x: jax.Array, *,
            block_rows: int = _TILED_BLOCK_ROWS,
            single_block_max_rows: int = _FAST_PATH_MAX_ROWS) -> jax.Array:
    """Un-stabilized softmax over a 1-D array (matches the reference module).

    NOTE: any x_i > ~88 (f32) overflows exp to inf and poisons the output with
    inf/nan, exactly like the reference's OverflowError -> inf behaviour.
    """
    assert x.ndim == 1, "reference Softmax operates on a 1-D tensor"
    assert block_rows % 8 == 0, "block_rows must be a multiple of 8"
    n = x.shape[0]
    out_dtype = x.dtype

    # Sublane-dense layout: (n,) -> (rows, 128).  When n is a multiple of 128
    # the reshape is a free contiguous bitcast and no pad/slice copies happen.
    rows = pl.cdiv(n, _LANES)
    padded_n = rows * _LANES
    ragged = padded_n != n
    if ragged:
        # exp(-inf) == 0 -> padded lanes contribute nothing to the sum.
        x = jnp.pad(x, (0, padded_n - n), mode="constant",
                    constant_values=-jnp.inf)
    x2d = x.reshape(rows, _LANES)

    if rows <= single_block_max_rows:
        # Small/medium-N fast path: single block, single pass, one HBM read
        # (2N bytes of traffic vs 3N for the two-phase path).
        out2d = pl.pallas_call(
            _softmax_single_block_kernel,
            out_shape=jax.ShapeDtypeStruct((rows, _LANES), out_dtype),
            grid=(1,),
            in_specs=[pl.BlockSpec((rows, _LANES), lambda i: (0, 0))],
            out_specs=pl.BlockSpec((rows, _LANES), lambda i: (0, 0)),
            compiler_params=pltpu.CompilerParams(
                dimension_semantics=("arbitrary",),
                vmem_limit_bytes=_VMEM_LIMIT_BYTES),
        )(x2d)
    else:
        # Two-phase tiled path.  Output index_map stays on block 0 during
        # phase 0 (nothing is written), so only fully-written blocks ever
        # reach HBM.  Both axes must be sequential: the VMEM accumulator
        # persists across all chunks of phase 0 and into phase 1.
        num_chunks = pl.cdiv(rows, block_rows)
        kernel = functools.partial(_softmax_two_phase_kernel,
                                   total_rows=rows, block_rows=block_rows)
        out2d = pl.pallas_call(
            kernel,
            out_shape=jax.ShapeDtypeStruct((rows, _LANES), out_dtype),
            grid_spec=pltpu.PrefetchScalarGridSpec(
                num_scalar_prefetch=0,
                grid=(2, num_chunks),
                in_specs=[pl.BlockSpec((block_rows, _LANES),
                                       lambda p, c: (c, 0))],
                out_specs=pl.BlockSpec((block_rows, _LANES),
                                       lambda p, c: (p * c, 0)),
                scratch_shapes=[pltpu.VMEM((1, _LANES), jnp.float32),
                                pltpu.VMEM((1, 1), jnp.float32)],
            ),
            compiler_params=pltpu.CompilerParams(
                dimension_semantics=("arbitrary", "arbitrary"),
                vmem_limit_bytes=_VMEM_LIMIT_BYTES,
            ),
        )(x2d)

    out = out2d.reshape(padded_n)
    return out[:n] if ragged else out


if __name__ == "__main__":
    key = jax.random.PRNGKey(0)

    def ref_softmax(v):
        e = jnp.exp(v.astype(jnp.float32))
        return (e / jnp.sum(e)).astype(v.dtype)

    # 1) 128-aligned fast path (zero host-side copies around the kernel).
    x1 = jax.random.normal(key, (1024,), dtype=jnp.float32)
    y1 = softmax(x1)
    jax.block_until_ready(y1)
    assert y1.shape == x1.shape
    assert jnp.allclose(y1, ref_softmax(x1), rtol=1e-4, atol=1e-8), "fast path (aligned)"

    # 2) Ragged fast path (n % 128 != 0 exercises the -inf tail pad).
    x2 = jax.random.normal(jax.random.fold_in(key, 1), (1000,), dtype=jnp.float32)
    y2 = softmax(x2)
    jax.block_until_ready(y2)
    assert y2.shape == x2.shape
    assert jnp.allclose(y2, ref_softmax(x2), rtol=1e-4, atol=1e-8), "fast path (ragged)"

    # 3) Force the tiled two-phase path at a small size: partial last chunk
    #    (in-kernel row masking) + ragged lane tail.
    x3 = jax.random.normal(jax.random.fold_in(key, 2), (2700,), dtype=jnp.float32)
    y3 = softmax(x3, block_rows=8, single_block_max_rows=8)
    jax.block_until_ready(y3)
    assert y3.shape == x3.shape
    assert jnp.allclose(y3, ref_softmax(x3), rtol=1e-4, atol=1e-8), "tiled path"

    print("KERNEL_OK")
</pallas_src>

<mosaic_0001>
module attributes {stable_mosaic.version = 11 : i64} {
  func.func @_softmax_single_block_kernel(%arg0: i32, %arg1: memref<8x128xf32, #tpu.memory_space<vmem>>, %arg2: memref<8x128xf32, #tpu.memory_space<vmem>>) attributes {dimension_semantics = [#tpu.dimension_semantics<arbitrary>], iteration_bounds = array<i64: 1>, scalar_prefetch = 0 : i64, scratch_operands = 0 : i64, tpu.core_type = #tpu.core_type<tc>, window_params = [{pipeline_mode = #tpu.pipeline_mode<synchronous>, transform_indices = @transform_0, window_bounds = array<i64: 8, 128>}, {pipeline_mode = #tpu.pipeline_mode<synchronous>, transform_indices = @transform_1, window_bounds = array<i64: 8, 128>}]} {
    %c0 = arith.constant 0 : index
    %c0_0 = arith.constant 0 : index
    %0 = vector.load %arg1[%c0, %c0_0] : memref<8x128xf32, #tpu.memory_space<vmem>>, vector<8x128xf32>
    %1 = math.exp %0 : vector<8x128xf32>
    %2 = vector.shape_cast %1 : vector<8x128xf32> to vector<1x8x128xf32>
    %cst = arith.constant dense<0.000000e+00> : vector<1xf32>
    %3 = vector.multi_reduction <add>, %2, %cst [1, 2] : vector<1x8x128xf32> to vector<1xf32>
    %4 = vector.shape_cast %3 : vector<1xf32> to vector<1x1x1xf32>
    %5 = vector.extract %4[0, 0, 0] : f32 from vector<1x1x1xf32>
    %6 = vector.broadcast %5 : f32 to vector<1x1xf32>
    %cst_1 = arith.constant 1.000000e+00 : f32
    %7 = vector.broadcast %cst_1 : f32 to vector<1x1xf32>
    %8 = arith.divf %7, %6 : vector<1x1xf32>
    %9 = vector.broadcast %8 : vector<1x1xf32> to vector<8x128xf32>
    %10 = arith.mulf %1, %9 : vector<8x128xf32>
    %c0_2 = arith.constant 0 : index
    %c0_3 = arith.constant 0 : index
    %11 = vector.load %arg2[%c0_2, %c0_3] : memref<8x128xf32, #tpu.memory_space<vmem>>, vector<8x128xf32>
    tpu.vector_store %arg2[%c0_2, %c0_3], %10 {strides = array<i32>} : memref<8x128xf32, #tpu.memory_space<vmem>>, vector<8x128xf32>,
    return
  }
  func.func @transform_0(%arg0: i32) -> (i32, i32) {
    %c0_i32 = arith.constant 0 : i32
    %c0_i32_0 = arith.constant 0 : i32
    %c0_i32_1 = arith.constant 0 : i32
    return %c0_i32, %c0_i32_0 : i32, i32
  }
  func.func @transform_1(%arg0: i32) -> (i32, i32) {
    %c0_i32 = arith.constant 0 : i32
    %c0_i32_0 = arith.constant 0 : i32
    %c0_i32_1 = arith.constant 0 : i32
    return %c0_i32, %c0_i32_0 : i32, i32
  }
}

</mosaic_0001>

<llo_original>
// kernel: tpu_custom_call.1
$region0: #{tpu_custom_call.1}
  #allocation0 [shape = 'u32[]', space=smem, size = 0x4, offset = 0x4, fixed_abs, tag = 'smem constant byte address 0x4 - core index']
  #allocation1 [shape = 'u32[144,128]{1,0:T(1,128)}', space=vmem, size = 0x12000, scoped, tag = 'internal scratch']
  %s0 = inlined_call_operand.hbm [shape: f32[8,128], index: 0, kind: input, shape index: {}]
  %s1 = inlined_call_operand.hbm [shape: f32[8,128], index: 1, kind: output, shape index: {}]
  %s2 = sld [smem:[#allocation0]]
  $region18: #{tpu_custom_call.1} parent=0
    _
  %s4 = ssub.s32 1, %s2
  %s5 = scalar_select 0, %s4, %s2
  $region1: #{tpu_custom_call.1} parent=0
    #allocation2 [shape = 'u8[4096]{0}', space=vmem, size = 0x1000, scoped, tag = 'input window, operand 0, single buffered']
    #allocation3 [shape = 's32[1]{0}', space=sflag, size = 0x4, scoped, tag = 'scoped memory for tpu_custom_call.1']
    #allocation4 [shape = 's32[1]{0}', space=sflag, size = 0x4, scoped, tag = 'scoped memory for tpu_custom_call.1']
    #allocation5 [shape = 'u8[4096]{0}', space=vmem, size = 0x1000, scoped, tag = 'output window, operand 0, single buffered']
    %6 = vsyncpa [#allocation3], 0
    %7 = vsyncpa [#allocation4], 0
    // Predicated region
    $region2: #{tpu_custom_call.1} parent=1 // pred_check
      _
    $region3: #{tpu_custom_call.1} parent=1 // pred_check_branch
      %9 = sbr.rel (0) target = $region5
    $region4: #{tpu_custom_call.1} parent=1 // pred_region
      %s11 = ssub.s32 128, 128
      %12 = vsyncadd [#allocation3], %s11
      %s14 = sshll.u32 [#allocation2], 4
      %s15 = int_to_ptr.vmem [resolvable:$true] %s14
      %17 = dma.hbm_to_vmem [thread:$0]  %s0, 128, %s15, [#allocation3]
    $region5: #{tpu_custom_call.1} parent=1 // pred_fallthru
      _
    // Predicated region
    $region6: #{tpu_custom_call.1} parent=1 // pred_check
      _
    $region7: #{tpu_custom_call.1} parent=1 // pred_check_branch
      %19 = sbr.rel (0) target = $region9
    $region8: #{tpu_custom_call.1} parent=1 // pred_region
      %20 = dma.done [#allocation3], 128
    $region9: #{tpu_custom_call.1} parent=1 // pred_fallthru
      _
    %v21 = vld [vmem:[#allocation2] sm:$0xff]
    %v22 = vmul.f32 %v21, 1.442695
    %v23 = vpow.pop %v22
    %24 = vadd.xlane.f32.xlu0 %v23
    %v25 = vpop.xlane.xlu0 %24
    %v26 = vrot.slane %v25, 4
    %v27 = vadd.f32 %v25, %v26
    %v28 = vrot.slane %v27, 2
    %v29 = vadd.f32 %v27, %v28
    %v30 = vrot.slane %v29, 1
    %v31 = vadd.f32 %v29, %v30
    %s32 = vtos %v31
    %v33 = vstv %s32
    %v34 = vrcp.pop %v33
    %v35 = vmul.f32 1.0, %v34
    %v36 = vmul.f32 %v23, %v35
    %37 = vst [vmem:[#allocation5] sm:$0xff] %v36
    // Predicated region
    $region10: #{tpu_custom_call.1} parent=1 // pred_check
      _
    $region11: #{tpu_custom_call.1} parent=1 // pred_check_branch
      %39 = sbr.rel (0) target = $region13
    $region12: #{tpu_custom_call.1} parent=1 // pred_region
      %s41 = ssub.s32 128, 128
      %42 = vsyncadd [#allocation4], %s41
      %s44 = sshll.u32 [#allocation5], 4
      %s45 = int_to_ptr.vmem [resolvable:$true] %s44
      %47 = dma.vmem_to_hbm [thread:$0]  %s45, 128, %s1, [#allocation4]
    $region13: #{tpu_custom_call.1} parent=1 // pred_fallthru
      _
    // Predicated region
    $region14: #{tpu_custom_call.1} parent=1 // pred_check
      _
    $region15: #{tpu_custom_call.1} parent=1 // pred_check_branch
      %49 = sbr.rel (0) target = $region17
    $region16: #{tpu_custom_call.1} parent=1 // pred_region
      %50 = dma.done [#allocation4], 128
    $region17: #{tpu_custom_call.1} parent=1 // pred_fallthru
      _
    %51 = vsyncpa [#allocation3], 1
    %52 = vsyncpa [#allocation4], 1

</llo_original>
